<compile_context>
chip_gen: v6e
topology: v6e:2x2x1
jax: 0.10.0
libtpu: 0.0.40
codegen_flags: <defaults>
</compile_context>

<pallas_src>
import functools

import jax
import jax.numpy as jnp
from jax.experimental import pallas as pl
from jax.experimental.pallas import tpu as pltpu


# ----------------------------------------------------------------------------
# Fused kernel: one grid step per batch element, (C, L) layout (time on lanes).
# ----------------------------------------------------------------------------
def _temporal_block_kernel(*refs, K, dilation, pad, has_downsample):
    if has_downsample:
        x_ref, w1_ref, b1_ref, w2_ref, b2_ref, dw_ref, db_ref, o_ref = refs
    else:
        x_ref, w1_ref, b1_ref, w2_ref, b2_ref, o_ref = refs

    x = x_ref[...]                         # (Cin, L), time on the lane axis
    L = x.shape[1]
    rf = (K - 1) * dilation                # trim per VALID dilated conv
    L1 = L - rf
    L2 = L1 - rf
    w1 = w1_ref[...]                       # (K, Cout, Cin)
    w2 = w2_ref[...]                       # (K, Cout, Cout)

    # ---- conv1 (dilated, VALID) + ReLU; dropout1 == identity (eval) --------
    acc1 = jnp.dot(w1[0], x[:, :L1], preferred_element_type=jnp.float32)
    for k in range(1, K):
        acc1 = acc1 + jnp.dot(w1[k], x[:, k * dilation:k * dilation + L1],
                              preferred_element_type=jnp.float32)
    h = jnp.maximum(acc1 + b1_ref[...], 0.0)            # (Cout, L1)

    # ---- conv2 (dilated, VALID) + ReLU; dropout2 == identity (eval) --------
    acc2 = jnp.dot(w2[0], h[:, :L2], preferred_element_type=jnp.float32)
    for k in range(1, K):
        acc2 = acc2 + jnp.dot(w2[k], h[:, k * dilation:k * dilation + L2],
                              preferred_element_type=jnp.float32)
    out = jnp.maximum(acc2 + b2_ref[...], 0.0)          # relu2 (inside self.net)

    # ---- residual: x[:, :, pad:-pad], optionally 1x1-conv downsampled ------
    xs = x[:, pad:L - pad]                              # (Cin, L2)
    if has_downsample:
        res = jnp.dot(dw_ref[...], xs,
                      preferred_element_type=jnp.float32) + db_ref[...]
    else:
        res = xs

    o_ref[...] = jnp.maximum(out + res, 0.0).astype(o_ref.dtype)


def my_temporal_block(x, params, *, kernel_size, stride, dilation, padding):
    """x: (B, Cin, L) float32 in PyTorch NCW layout. params: PyTorch-layout weights."""
    assert stride == 1, "residual add in MyTemporalBlock only shape-checks for stride=1"
    # TODO(synk): stride > 1 (strided time slices) not implemented.
    B, Cin, L = x.shape
    K = kernel_size
    Cout = params['w1'].shape[0]
    L2 = L - 2 * (K - 1) * dilation
    assert L - 2 * padding == L2, "padding must equal (kernel_size - 1) * dilation"

    # PyTorch Conv1d weight (Cout, Cin, K) -> per-tap (K, Cout, Cin); biases -> columns.
    w1 = jnp.transpose(params['w1'], (2, 0, 1))
    w2 = jnp.transpose(params['w2'], (2, 0, 1))
    b1 = params['b1'].reshape(Cout, 1)
    b2 = params['b2'].reshape(Cout, 1)
    has_ds = 'dw' in params

    def const_spec(a):
        return pl.BlockSpec(a.shape, lambda b, _n=a.ndim: (0,) * _n)

    args = [x, w1, b1, w2, b2]
    in_specs = [pl.BlockSpec((pl.Squeezed(), Cin, L), lambda b: (b, 0, 0)),
                const_spec(w1), const_spec(b1), const_spec(w2), const_spec(b2)]
    if has_ds:
        dw = params['dw']                               # (Cout, Cin) = Conv1d(Cin,Cout,1) weight[:,:,0]
        db = params['db'].reshape(Cout, 1)
        args += [dw, db]
        in_specs += [const_spec(dw), const_spec(db)]

    kernel = functools.partial(_temporal_block_kernel, K=K, dilation=dilation,
                               pad=padding, has_downsample=has_ds)
    return pl.pallas_call(
        kernel,
        out_shape=jax.ShapeDtypeStruct((B, Cout, L2), jnp.float32),
        grid=(B,),
        in_specs=in_specs,
        out_specs=pl.BlockSpec((pl.Squeezed(), Cout, L2), lambda b: (b, 0, 0)),
        compiler_params=pltpu.CompilerParams(dimension_semantics=("parallel",)),
    )(*args)


# ----------------------------------------------------------------------------
# Pure-JAX reference (lax.conv) for the correctness smoke test
# ----------------------------------------------------------------------------
def ref_temporal_block(x, params, *, kernel_size, stride, dilation, padding):
    del kernel_size, stride
    prec = jax.lax.Precision.HIGHEST

    def dconv(h, w, b):
        y = jax.lax.conv_general_dilated(
            h, w, window_strides=(1,), padding='VALID', rhs_dilation=(dilation,),
            dimension_numbers=('NCW', 'OIW', 'NCW'), precision=prec)
        return y + b[None, :, None]

    out = jax.nn.relu(dconv(x, params['w1'], params['b1']))
    out = jax.nn.relu(dconv(out, params['w2'], params['b2']))
    xs = x[:, :, padding:-padding]
    if 'dw' in params:
        res = jnp.einsum('oc,bcl->bol', params['dw'], xs,
                         precision=prec) + params['db'][None, :, None]
    else:
        res = xs
    return jax.nn.relu(out + res)


# ----------------------------------------------------------------------------
# Deterministic parameters (PyTorch layouts)
# ----------------------------------------------------------------------------
def init_block_params(key, n_inputs, n_outputs, kernel_size):
    ks = jax.random.split(key, 6)

    def nrm(k, shape, scale):
        return (scale * jax.random.normal(k, shape)).astype(jnp.float32)

    p = {
        'w1': nrm(ks[0], (n_outputs, n_inputs, kernel_size), 0.1),
        'b1': nrm(ks[1], (n_outputs,), 0.05),
        'w2': nrm(ks[2], (n_outputs, n_outputs, kernel_size), 0.1),
        'b2': nrm(ks[3], (n_outputs,), 0.05),
    }
    if n_inputs != n_outputs:
        p['dw'] = nrm(ks[4], (n_outputs, n_inputs), 0.1)
        p['db'] = nrm(ks[5], (n_outputs,), 0.05)
    return p


if __name__ == "__main__":
    key = jax.random.PRNGKey(0)
    kx, ka, kb = jax.random.split(key, 3)

    # Block A: MyTemporalBlock(4, 6, kernel_size=3, stride=1, dilation=1, padding=2)
    #   -> exercises the downsample (1x1 conv) residual path.
    # Block B: MyTemporalBlock(6, 6, kernel_size=3, stride=1, dilation=2, padding=4)
    #   -> exercises dilation>1 and the identity residual path.
    B, Cin, L = 2, 4, 140
    x = jax.random.normal(kx, (B, Cin, L), dtype=jnp.float32)

    pa = init_block_params(ka, 4, 6, 3)
    pb = init_block_params(kb, 6, 6, 3)

    ya = my_temporal_block(x, pa, kernel_size=3, stride=1, dilation=1, padding=2)
    yb = my_temporal_block(ya, pb, kernel_size=3, stride=1, dilation=2, padding=4)
    ya, yb = jax.block_until_ready((ya, yb))

    ra = ref_temporal_block(x, pa, kernel_size=3, stride=1, dilation=1, padding=2)
    rb = ref_temporal_block(ra, pb, kernel_size=3, stride=1, dilation=2, padding=4)
    rb = jax.block_until_ready(rb)

    assert ya.shape == (B, 6, 136), ya.shape
    assert yb.shape == (B, 6, 128), yb.shape
    assert jnp.allclose(ya, ra, rtol=2e-2, atol=2e-3), (ya, ra)
    assert jnp.allclose(yb, rb, rtol=2e-2, atol=2e-3), (yb, rb)
    print("KERNEL_OK")
</pallas_src>

<mosaic_0001>
module attributes {stable_mosaic.version = 11 : i64} {
  func.func @_temporal_block_kernel(%arg0: i32, %arg1: memref<1x4x140xf32, #tpu.memory_space<vmem>>, %arg2: memref<3x6x4xf32, #tpu.memory_space<vmem>>, %arg3: memref<6x1xf32, #tpu.memory_space<vmem>>, %arg4: memref<3x6x6xf32, #tpu.memory_space<vmem>>, %arg5: memref<6x1xf32, #tpu.memory_space<vmem>>, %arg6: memref<6x4xf32, #tpu.memory_space<vmem>>, %arg7: memref<6x1xf32, #tpu.memory_space<vmem>>, %arg8: memref<1x6x136xf32, #tpu.memory_space<vmem>>) attributes {dimension_semantics = [#tpu.dimension_semantics<parallel>], iteration_bounds = array<i64: 2>, scalar_prefetch = 0 : i64, scratch_operands = 0 : i64, tpu.core_type = #tpu.core_type<tc>, window_params = [{transform_indices = @transform_0, window_bounds = array<i64: 1, 4, 140>}, {pipeline_mode = #tpu.pipeline_mode<synchronous>, transform_indices = @transform_1, window_bounds = array<i64: 3, 6, 4>}, {pipeline_mode = #tpu.pipeline_mode<synchronous>, transform_indices = @transform_2, window_bounds = array<i64: 6, 1>}, {pipeline_mode = #tpu.pipeline_mode<synchronous>, transform_indices = @transform_3, window_bounds = array<i64: 3, 6, 6>}, {pipeline_mode = #tpu.pipeline_mode<synchronous>, transform_indices = @transform_4, window_bounds = array<i64: 6, 1>}, {pipeline_mode = #tpu.pipeline_mode<synchronous>, transform_indices = @transform_5, window_bounds = array<i64: 6, 4>}, {pipeline_mode = #tpu.pipeline_mode<synchronous>, transform_indices = @transform_6, window_bounds = array<i64: 6, 1>}, {transform_indices = @transform_7, window_bounds = array<i64: 1, 6, 136>}]} {
    %c0 = arith.constant 0 : index
    %c0_0 = arith.constant 0 : index
    %c0_1 = arith.constant 0 : index
    %0 = vector.load %arg1[%c0, %c0_0, %c0_1] : memref<1x4x140xf32, #tpu.memory_space<vmem>>, vector<1x4x140xf32>
    %1 = vector.shape_cast %0 : vector<1x4x140xf32> to vector<4x140xf32>
    %c0_2 = arith.constant 0 : index
    %c0_3 = arith.constant 0 : index
    %c0_4 = arith.constant 0 : index
    %2 = vector.load %arg2[%c0_2, %c0_3, %c0_4] : memref<3x6x4xf32, #tpu.memory_space<vmem>>, vector<3x6x4xf32>
    %c0_5 = arith.constant 0 : index
    %c0_6 = arith.constant 0 : index
    %c0_7 = arith.constant 0 : index
    %3 = vector.load %arg4[%c0_5, %c0_6, %c0_7] : memref<3x6x6xf32, #tpu.memory_space<vmem>>, vector<3x6x6xf32>
    %4 = vector.extract_strided_slice %2 {offsets = [0, 0, 0], sizes = [1, 6, 4], strides = [1, 1, 1]} : vector<3x6x4xf32> to vector<1x6x4xf32>
    %5 = vector.shape_cast %4 : vector<1x6x4xf32> to vector<6x4xf32>
    %6 = vector.extract_strided_slice %1 {offsets = [0, 0], sizes = [4, 138], strides = [1, 1]} : vector<4x140xf32> to vector<4x138xf32>
    %cst = arith.constant dense<0.000000e+00> : vector<6x138xf32>
    %7 = tpu.matmul %5, %6, %cst {dimension_numbers = #tpu.dot_dimension_numbers<[1], [0], [0], [1], [0, 0, 1, 1], [], []>} : vector<6x4xf32>, vector<4x138xf32>, vector<6x138xf32> -> vector<6x138xf32>
    %8 = vector.extract_strided_slice %2 {offsets = [1, 0, 0], sizes = [1, 6, 4], strides = [1, 1, 1]} : vector<3x6x4xf32> to vector<1x6x4xf32>
    %9 = vector.shape_cast %8 : vector<1x6x4xf32> to vector<6x4xf32>
    %10 = vector.extract_strided_slice %1 {offsets = [0, 1], sizes = [4, 138], strides = [1, 1]} : vector<4x140xf32> to vector<4x138xf32>
    %cst_8 = arith.constant dense<0.000000e+00> : vector<6x138xf32>
    %11 = tpu.matmul %9, %10, %cst_8 {dimension_numbers = #tpu.dot_dimension_numbers<[1], [0], [0], [1], [0, 0, 1, 1], [], []>} : vector<6x4xf32>, vector<4x138xf32>, vector<6x138xf32> -> vector<6x138xf32>
    %12 = arith.addf %7, %11 : vector<6x138xf32>
    %13 = vector.extract_strided_slice %2 {offsets = [2, 0, 0], sizes = [1, 6, 4], strides = [1, 1, 1]} : vector<3x6x4xf32> to vector<1x6x4xf32>
    %14 = vector.shape_cast %13 : vector<1x6x4xf32> to vector<6x4xf32>
    %15 = vector.extract_strided_slice %1 {offsets = [0, 2], sizes = [4, 138], strides = [1, 1]} : vector<4x140xf32> to vector<4x138xf32>
    %cst_9 = arith.constant dense<0.000000e+00> : vector<6x138xf32>
    %16 = tpu.matmul %14, %15, %cst_9 {dimension_numbers = #tpu.dot_dimension_numbers<[1], [0], [0], [1], [0, 0, 1, 1], [], []>} : vector<6x4xf32>, vector<4x138xf32>, vector<6x138xf32> -> vector<6x138xf32>
    %17 = arith.addf %12, %16 : vector<6x138xf32>
    %c0_10 = arith.constant 0 : index
    %c0_11 = arith.constant 0 : index
    %18 = vector.load %arg3[%c0_10, %c0_11] : memref<6x1xf32, #tpu.memory_space<vmem>>, vector<6x1xf32>
    %19 = vector.broadcast %18 : vector<6x1xf32> to vector<6x138xf32>
    %20 = arith.addf %17, %19 : vector<6x138xf32>
    %cst_12 = arith.constant 0.000000e+00 : f32
    %21 = vector.broadcast %cst_12 : f32 to vector<6x138xf32>
    %22 = arith.maximumf %20, %21 : vector<6x138xf32>
    %23 = vector.extract_strided_slice %3 {offsets = [0, 0, 0], sizes = [1, 6, 6], strides = [1, 1, 1]} : vector<3x6x6xf32> to vector<1x6x6xf32>
    %24 = vector.shape_cast %23 : vector<1x6x6xf32> to vector<6x6xf32>
    %25 = vector.extract_strided_slice %22 {offsets = [0, 0], sizes = [6, 136], strides = [1, 1]} : vector<6x138xf32> to vector<6x136xf32>
    %cst_13 = arith.constant dense<0.000000e+00> : vector<6x136xf32>
    %26 = tpu.matmul %24, %25, %cst_13 {dimension_numbers = #tpu.dot_dimension_numbers<[1], [0], [0], [1], [0, 0, 1, 1], [], []>} : vector<6x6xf32>, vector<6x136xf32>, vector<6x136xf32> -> vector<6x136xf32>
    %27 = vector.extract_strided_slice %3 {offsets = [1, 0, 0], sizes = [1, 6, 6], strides = [1, 1, 1]} : vector<3x6x6xf32> to vector<1x6x6xf32>
    %28 = vector.shape_cast %27 : vector<1x6x6xf32> to vector<6x6xf32>
    %29 = vector.extract_strided_slice %22 {offsets = [0, 1], sizes = [6, 136], strides = [1, 1]} : vector<6x138xf32> to vector<6x136xf32>
    %cst_14 = arith.constant dense<0.000000e+00> : vector<6x136xf32>
    %30 = tpu.matmul %28, %29, %cst_14 {dimension_numbers = #tpu.dot_dimension_numbers<[1], [0], [0], [1], [0, 0, 1, 1], [], []>} : vector<6x6xf32>, vector<6x136xf32>, vector<6x136xf32> -> vector<6x136xf32>
    %31 = arith.addf %26, %30 : vector<6x136xf32>
    %32 = vector.extract_strided_slice %3 {offsets = [2, 0, 0], sizes = [1, 6, 6], strides = [1, 1, 1]} : vector<3x6x6xf32> to vector<1x6x6xf32>
    %33 = vector.shape_cast %32 : vector<1x6x6xf32> to vector<6x6xf32>
    %34 = vector.extract_strided_slice %22 {offsets = [0, 2], sizes = [6, 136], strides = [1, 1]} : vector<6x138xf32> to vector<6x136xf32>
    %cst_15 = arith.constant dense<0.000000e+00> : vector<6x136xf32>
    %35 = tpu.matmul %33, %34, %cst_15 {dimension_numbers = #tpu.dot_dimension_numbers<[1], [0], [0], [1], [0, 0, 1, 1], [], []>} : vector<6x6xf32>, vector<6x136xf32>, vector<6x136xf32> -> vector<6x136xf32>
    %36 = arith.addf %31, %35 : vector<6x136xf32>
    %c0_16 = arith.constant 0 : index
    %c0_17 = arith.constant 0 : index
    %37 = vector.load %arg5[%c0_16, %c0_17] : memref<6x1xf32, #tpu.memory_space<vmem>>, vector<6x1xf32>
    %38 = vector.broadcast %37 : vector<6x1xf32> to vector<6x136xf32>
    %39 = arith.addf %36, %38 : vector<6x136xf32>
    %cst_18 = arith.constant 0.000000e+00 : f32
    %40 = vector.broadcast %cst_18 : f32 to vector<6x136xf32>
    %41 = arith.maximumf %39, %40 : vector<6x136xf32>
    %42 = vector.extract_strided_slice %1 {offsets = [0, 2], sizes = [4, 136], strides = [1, 1]} : vector<4x140xf32> to vector<4x136xf32>
    %c0_19 = arith.constant 0 : index
    %c0_20 = arith.constant 0 : index
    %43 = vector.load %arg6[%c0_19, %c0_20] : memref<6x4xf32, #tpu.memory_space<vmem>>, vector<6x4xf32>
    %cst_21 = arith.constant dense<0.000000e+00> : vector<6x136xf32>
    %44 = tpu.matmul %43, %42, %cst_21 {dimension_numbers = #tpu.dot_dimension_numbers<[1], [0], [0], [1], [0, 0, 1, 1], [], []>} : vector<6x4xf32>, vector<4x136xf32>, vector<6x136xf32> -> vector<6x136xf32>
    %c0_22 = arith.constant 0 : index
    %c0_23 = arith.constant 0 : index
    %45 = vector.load %arg7[%c0_22, %c0_23] : memref<6x1xf32, #tpu.memory_space<vmem>>, vector<6x1xf32>
    %46 = vector.broadcast %45 : vector<6x1xf32> to vector<6x136xf32>
    %47 = arith.addf %44, %46 : vector<6x136xf32>
    %48 = arith.addf %41, %47 : vector<6x136xf32>
    %cst_24 = arith.constant 0.000000e+00 : f32
    %49 = vector.broadcast %cst_24 : f32 to vector<6x136xf32>
    %50 = arith.maximumf %48, %49 : vector<6x136xf32>
    %c0_25 = arith.constant 0 : index
    %c0_26 = arith.constant 0 : index
    %c0_27 = arith.constant 0 : index
    %51 = vector.load %arg8[%c0_25, %c0_26, %c0_27] : memref<1x6x136xf32, #tpu.memory_space<vmem>>, vector<1x6x136xf32>
    %52 = vector.shape_cast %51 : vector<1x6x136xf32> to vector<6x136xf32>
    %53 = vector.shape_cast %50 : vector<6x136xf32> to vector<1x6x136xf32>
    tpu.vector_store %arg8[%c0_25, %c0_26, %c0_27], %53 {strides = array<i32>} : memref<1x6x136xf32, #tpu.memory_space<vmem>>, vector<1x6x136xf32>,
    return
  }
  func.func @transform_0(%arg0: i32) -> (i32, i32, i32) {
    %c0_i32 = arith.constant 0 : i32
    %c0_i32_0 = arith.constant 0 : i32
    %c0_i32_1 = arith.constant 0 : i32
    return %arg0, %c0_i32, %c0_i32_0 : i32, i32, i32
  }
  func.func @transform_1(%arg0: i32) -> (i32, i32, i32) {
    %c0_i32 = arith.constant 0 : i32
    %c0_i32_0 = arith.constant 0 : i32
    %c0_i32_1 = arith.constant 0 : i32
    %c0_i32_2 = arith.constant 0 : i32
    return %c0_i32, %c0_i32_0, %c0_i32_1 : i32, i32, i32
  }
  func.func @transform_2(%arg0: i32) -> (i32, i32) {
    %c0_i32 = arith.constant 0 : i32
    %c0_i32_0 = arith.constant 0 : i32
    %c0_i32_1 = arith.constant 0 : i32
    return %c0_i32, %c0_i32_0 : i32, i32
  }
  func.func @transform_3(%arg0: i32) -> (i32, i32, i32) {
    %c0_i32 = arith.constant 0 : i32
    %c0_i32_0 = arith.constant 0 : i32
    %c0_i32_1 = arith.constant 0 : i32
    %c0_i32_2 = arith.constant 0 : i32
    return %c0_i32, %c0_i32_0, %c0_i32_1 : i32, i32, i32
  }
  func.func @transform_4(%arg0: i32) -> (i32, i32) {
    %c0_i32 = arith.constant 0 : i32
    %c0_i32_0 = arith.constant 0 : i32
    %c0_i32_1 = arith.constant 0 : i32
    return %c0_i32, %c0_i32_0 : i32, i32
  }
  func.func @transform_5(%arg0: i32) -> (i32, i32) {
    %c0_i32 = arith.constant 0 : i32
    %c0_i32_0 = arith.constant 0 : i32
    %c0_i32_1 = arith.constant 0 : i32
    return %c0_i32, %c0_i32_0 : i32, i32
  }
  func.func @transform_6(%arg0: i32) -> (i32, i32) {
    %c0_i32 = arith.constant 0 : i32
    %c0_i32_0 = arith.constant 0 : i32
    %c0_i32_1 = arith.constant 0 : i32
    return %c0_i32, %c0_i32_0 : i32, i32
  }
  func.func @transform_7(%arg0: i32) -> (i32, i32, i32) {
    %c0_i32 = arith.constant 0 : i32
    %c0_i32_0 = arith.constant 0 : i32
    %c0_i32_1 = arith.constant 0 : i32
    return %arg0, %c0_i32, %c0_i32_0 : i32, i32, i32
  }
}

</mosaic_0001>

<llo_original>
// kernel: tpu_custom_call.1
$region0: #{tpu_custom_call.1}
  #allocation0 [shape = 'u32[]', space=smem, size = 0x4, offset = 0x4, fixed_abs, tag = 'smem constant byte address 0x4 - core index']
  #allocation1 [shape = 'u32[144,128]{1,0:T(1,128)}', space=vmem, size = 0x12000, scoped, tag = 'internal scratch']
  %s0 = inlined_call_operand.vmem [shape: f32[2,4,140], index: 0, kind: input, shape index: {}]
  %s1 = inlined_call_operand.vmem [shape: f32[3,6,4], index: 1, kind: input, shape index: {}]
  %s2 = inlined_call_operand.vmem [shape: f32[6,1], index: 2, kind: input, shape index: {}]
  %s3 = inlined_call_operand.vmem [shape: f32[3,6,6], index: 3, kind: input, shape index: {}]
  %s4 = inlined_call_operand.vmem [shape: f32[6,1], index: 4, kind: input, shape index: {}]
  %s5 = inlined_call_operand.vmem [shape: f32[6,4], index: 5, kind: input, shape index: {}]
  %s6 = inlined_call_operand.vmem [shape: f32[6,1], index: 6, kind: input, shape index: {}]
  %s7 = inlined_call_operand.vmem [shape: f32[2,6,136], index: 7, kind: output, shape index: {}]
  %s8 = sld [smem:[#allocation0]]
  $region61: #{tpu_custom_call.1} parent=0
    _
  %s10 = ssub.s32 1, %s8
  %s11 = scalar_select 0, %s10, %s8
  loop: start=0, step=1, limit=4
  $region2: #{tpu_custom_call.1} parent=0 // loop_pre_header
    _
  $region3: #{tpu_custom_call.1} parent=0 // loop_header
    %s13 = sphi 0, %s17
    %p14 = scmp.ge.s32.totalorder %s13, 4
    %s23 = sphi 0, %s25
    %s26 = sphi 0, %s23
    %s27 = sphi 0, %s26
    %s43 = sphi 0, %s27
    %s47 = sphi 0, %s47
    %s49 = sphi 0, %s47
    %s50 = sphi 0, %s49
    %s64 = sphi 0, %s50
    %s68 = sphi 0, %s68
    %s70 = sphi 0, %s68
    %s71 = sphi 0, %s70
    %s85 = sphi 0, %s71
    %s89 = sphi 0, %s89
    %s91 = sphi 0, %s89
    %s92 = sphi 0, %s91
    %s106 = sphi 0, %s92
    %s110 = sphi 0, %s110
    %s112 = sphi 0, %s110
    %s113 = sphi 0, %s112
    %s127 = sphi 0, %s113
    %s131 = sphi 0, %s131
    %s133 = sphi 0, %s131
    %s134 = sphi 0, %s133
    %s148 = sphi 0, %s134
    %s152 = sphi 0, %s152
    %s154 = sphi 0, %s152
    %s155 = sphi 0, %s154
    %s169 = sphi 0, %s155
    %s175 = sphi 0, %s177
    %s178 = sphi 0, %s175
    %s179 = sphi 0, %s178
    %s195 = sphi 0, %s179
  $region4: #{tpu_custom_call.1} parent=0 // loop_header_branch
    %16 = sbr.rel (%p14) target = $region8
  $region5: #{tpu_custom_call.1} parent=0 // loop_body
    %s18 = ssub.s32 %s13, 1
    %s19 = ssub.s32 %s13, 2
    %s20 = sadd.s32 %s13, 1
    %s21 = ssub.s32 %s13, %s20
    %p22 = scmp.eq.s32.totalorder %s21, 0
    %s24 = sadd.s32 %s23, 1
    %s25 = scalar_select %p22, %s23, %s24
    %p28 = pneg %p22
    %p29 = scmp.eq.s32.totalorder %s13, 1
    %p30 = por %p28, %p29
    %p31 = scmp.ne.s32.totalorder %s23, %s26
    %p32 = scmp.eq.s32.totalorder %s13, 0
    %p33 = por %p31, %p32
    %p34 = scmp.ne.s32.totalorder %s23, %s26
    %p35 = scmp.eq.s32.totalorder %s18, 1
    %p36 = por %p34, %p35
    %p37 = scmp.ne.s32.totalorder %s26, %s27
    %p38 = scmp.eq.s32.totalorder %s18, 0
    %p39 = por %p37, %p38
    %p40 = scmp.ne.s32.totalorder %s26, %s27
    %p41 = scmp.eq.s32.totalorder %s19, 1
    %p42 = por %p40, %p41
    %p44 = scmp.ne.s32.totalorder %s27, %s43
    %p45 = scmp.eq.s32.totalorder %s19, 0
    %p46 = por %p44, %p45
    %s48 = sadd.s32 %s47, 1
    %p51 = scmp.eq.s32.totalorder %s13, 1
    %p52 = scmp.ne.s32.totalorder %s47, %s49
    %p53 = scmp.eq.s32.totalorder %s13, 0
    %p54 = por %p52, %p53
    %p55 = scmp.ne.s32.totalorder %s47, %s49
    %p56 = scmp.eq.s32.totalorder %s18, 1
    %p57 = por %p55, %p56
    %p58 = scmp.ne.s32.totalorder %s49, %s50
    %p59 = scmp.eq.s32.totalorder %s18, 0
    %p60 = por %p58, %p59
    %p61 = scmp.ne.s32.totalorder %s49, %s50
    %p62 = scmp.eq.s32.totalorder %s19, 1
    %p63 = por %p61, %p62
    %p65 = scmp.ne.s32.totalorder %s50, %s64
    %p66 = scmp.eq.s32.totalorder %s19, 0
    %p67 = por %p65, %p66
    %s69 = sadd.s32 %s68, 1
    %p72 = scmp.eq.s32.totalorder %s13, 1
    %p73 = scmp.ne.s32.totalorder %s68, %s70
    %p74 = scmp.eq.s32.totalorder %s13, 0
    %p75 = por %p73, %p74
    %p76 = scmp.ne.s32.totalorder %s68, %s70
    %p77 = scmp.eq.s32.totalorder %s18, 1
    %p78 = por %p76, %p77
    %p79 = scmp.ne.s32.totalorder %s70, %s71
    %p80 = scmp.eq.s32.totalorder %s18, 0
    %p81 = por %p79, %p80
    %p82 = scmp.ne.s32.totalorder %s70, %s71
    %p83 = scmp.eq.s32.totalorder %s19, 1
    %p84 = por %p82, %p83
    %p86 = scmp.ne.s32.totalorder %s71, %s85
    %p87 = scmp.eq.s32.totalorder %s19, 0
    %p88 = por %p86, %p87
    %s90 = sadd.s32 %s89, 1
    %p93 = scmp.eq.s32.totalorder %s13, 1
    %p94 = scmp.ne.s32.totalorder %s89, %s91
    %p95 = scmp.eq.s32.totalorder %s13, 0
    %p96 = por %p94, %p95
    %p97 = scmp.ne.s32.totalorder %s89, %s91
    %p98 = scmp.eq.s32.totalorder %s18, 1
    %p99 = por %p97, %p98
    %p100 = scmp.ne.s32.totalorder %s91, %s92
    %p101 = scmp.eq.s32.totalorder %s18, 0
    %p102 = por %p100, %p101
    %p103 = scmp.ne.s32.totalorder %s91, %s92
    %p104 = scmp.eq.s32.totalorder %s19, 1
    %p105 = por %p103, %p104
    %p107 = scmp.ne.s32.totalorder %s92, %s106
    %p108 = scmp.eq.s32.totalorder %s19, 0
    %p109 = por %p107, %p108
    %s111 = sadd.s32 %s110, 1
    %p114 = scmp.eq.s32.totalorder %s13, 1
    %p115 = scmp.ne.s32.totalorder %s110, %s112
    %p116 = scmp.eq.s32.totalorder %s13, 0
    %p117 = por %p115, %p116
    %p118 = scmp.ne.s32.totalorder %s110, %s112
    %p119 = scmp.eq.s32.totalorder %s18, 1
    %p120 = por %p118, %p119
    %p121 = scmp.ne.s32.totalorder %s112, %s113
    %p122 = scmp.eq.s32.totalorder %s18, 0
    %p123 = por %p121, %p122
    %p124 = scmp.ne.s32.totalorder %s112, %s113
    %p125 = scmp.eq.s32.totalorder %s19, 1
    %p126 = por %p124, %p125
    %p128 = scmp.ne.s32.totalorder %s113, %s127
    %p129 = scmp.eq.s32.totalorder %s19, 0
    %p130 = por %p128, %p129
    %s132 = sadd.s32 %s131, 1
    %p135 = scmp.eq.s32.totalorder %s13, 1
    %p136 = scmp.ne.s32.totalorder %s131, %s133
    %p137 = scmp.eq.s32.totalorder %s13, 0
    %p138 = por %p136, %p137
    %p139 = scmp.ne.s32.totalorder %s131, %s133
    %p140 = scmp.eq.s32.totalorder %s18, 1
    %p141 = por %p139, %p140
    %p142 = scmp.ne.s32.totalorder %s133, %s134
    %p143 = scmp.eq.s32.totalorder %s18, 0
    %p144 = por %p142, %p143
    %p145 = scmp.ne.s32.totalorder %s133, %s134
    %p146 = scmp.eq.s32.totalorder %s19, 1
    %p147 = por %p145, %p146
    %p149 = scmp.ne.s32.totalorder %s134, %s148
    %p150 = scmp.eq.s32.totalorder %s19, 0
    %p151 = por %p149, %p150
    %s153 = sadd.s32 %s152, 1
    %p156 = scmp.eq.s32.totalorder %s13, 1
    %p157 = scmp.ne.s32.totalorder %s152, %s154
    %p158 = scmp.eq.s32.totalorder %s13, 0
    %p159 = por %p157, %p158
    %p160 = scmp.ne.s32.totalorder %s152, %s154
    %p161 = scmp.eq.s32.totalorder %s18, 1
    %p162 = por %p160, %p161
    %p163 = scmp.ne.s32.totalorder %s154, %s155
    %p164 = scmp.eq.s32.totalorder %s18, 0
    %p165 = por %p163, %p164
    %p166 = scmp.ne.s32.totalorder %s154, %s155
    %p167 = scmp.eq.s32.totalorder %s19, 1
    %p168 = por %p166, %p167
    %p170 = scmp.ne.s32.totalorder %s155, %s169
    %p171 = scmp.eq.s32.totalorder %s19, 0
    %p172 = por %p170, %p171
    %s173 = ssub.s32 %s13, %s20
    %p174 = scmp.eq.s32.totalorder %s173, 0
    %s176 = sadd.s32 %s175, 1
    %s177 = scalar_select %p174, %s175, %s176
    %p180 = pneg %p174
    %p181 = scmp.eq.s32.totalorder %s13, 1
    %p182 = por %p180, %p181
    %p183 = scmp.ne.s32.totalorder %s175, %s178
    %p184 = scmp.eq.s32.totalorder %s13, 0
    %p185 = por %p183, %p184
    %p186 = scmp.ne.s32.totalorder %s175, %s178
    %p187 = scmp.eq.s32.totalorder %s18, 1
    %p188 = por %p186, %p187
    %p189 = scmp.ne.s32.totalorder %s178, %s179
    %p190 = scmp.eq.s32.totalorder %s18, 0
    %p191 = por %p189, %p190
    %p192 = scmp.ne.s32.totalorder %s178, %s179
    %p193 = scmp.eq.s32.totalorder %s19, 1
    %p194 = por %p192, %p193
    %p196 = scmp.ne.s32.totalorder %s179, %s195
    %p197 = scmp.eq.s32.totalorder %s19, 0
    %p198 = por %p196, %p197
    %p199 = scmp.le.s32.totalorder 1, %s13
    %p200 = scmp.lt.s32.totalorder %s13, 3
    %p201 = pnand %p199, %p200
    %p202 = pneg %p201
    // Predicated region
    $region9: #{tpu_custom_call.1} parent=5 // pred_check
      _
    $region10: #{tpu_custom_call.1} parent=5 // pred_check_branch
      %204 = sbr.rel (%p201) target = $region12
    $region11: #{tpu_custom_call.1} parent=5 // pred_region
      %s205 = ssub.s32 %s13, 1
      // Predicated region
      $region13: #{tpu_custom_call.1} parent=11 // pred_check
        %p206 = pneg %p60
      $region14: #{tpu_custom_call.1} parent=11 // pred_check_branch
        %208 = sbr.rel (%p206) target = $region16
      $region15: #{tpu_custom_call.1} parent=11 // pred_region
        _
      $region16: #{tpu_custom_call.1} parent=11 // pred_fallthru
        _
      // Predicated region
      $region17: #{tpu_custom_call.1} parent=11 // pred_check
        %p209 = pneg %p81
      $region18: #{tpu_custom_call.1} parent=11 // pred_check_branch
        %211 = sbr.rel (%p209) target = $region20
      $region19: #{tpu_custom_call.1} parent=11 // pred_region
        _
      $region20: #{tpu_custom_call.1} parent=11 // pred_fallthru
        _
      // Predicated region
      $region21: #{tpu_custom_call.1} parent=11 // pred_check
        %p212 = pneg %p102
      $region22: #{tpu_custom_call.1} parent=11 // pred_check_branch
        %214 = sbr.rel (%p212) target = $region24
      $region23: #{tpu_custom_call.1} parent=11 // pred_region
        _
      $region24: #{tpu_custom_call.1} parent=11 // pred_fallthru
        _
      // Predicated region
      $region25: #{tpu_custom_call.1} parent=11 // pred_check
        %p215 = pneg %p123
      $region26: #{tpu_custom_call.1} parent=11 // pred_check_branch
        %217 = sbr.rel (%p215) target = $region28
      $region27: #{tpu_custom_call.1} parent=11 // pred_region
        _
      $region28: #{tpu_custom_call.1} parent=11 // pred_fallthru
        _
      // Predicated region
      $region29: #{tpu_custom_call.1} parent=11 // pred_check
        %p218 = pneg %p144
      $region30: #{tpu_custom_call.1} parent=11 // pred_check_branch
        %220 = sbr.rel (%p218) target = $region32
      $region31: #{tpu_custom_call.1} parent=11 // pred_region
        _
      $region32: #{tpu_custom_call.1} parent=11 // pred_fallthru
        _
      // Predicated region
      $region33: #{tpu_custom_call.1} parent=11 // pred_check
        %p221 = pneg %p165
      $region34: #{tpu_custom_call.1} parent=11 // pred_check_branch
        %223 = sbr.rel (%p221) target = $region36
      $region35: #{tpu_custom_call.1} parent=11 // pred_region
        _
      $region36: #{tpu_custom_call.1} parent=11 // pred_fallthru
        _
    $region12: #{tpu_custom_call.1} parent=5 // pred_fallthru
      _
    %p224 = scmp.lt.s32.totalorder %s13, 2
    // Predicated region
    $region37: #{tpu_custom_call.1} parent=5 // pred_check
      %p225 = pneg %p224
    $region38: #{tpu_custom_call.1} parent=5 // pred_check_branch
      %227 = sbr.rel (%p225) target = $region40
    $region39: #{tpu_custom_call.1} parent=5 // pred_region
      // Predicated region
      $region41: #{tpu_custom_call.1} parent=39 // pred_check
        %p228 = pneg %p33
      $region42: #{tpu_custom_call.1} parent=39 // pred_check_branch
        %230 = sbr.rel (%p228) target = $region44
      $region43: #{tpu_custom_call.1} parent=39 // pred_region
        %p231 = scmp.lt.s32.totalorder %s13, 1
        %s232 = scalar_select %p231, %s13, 1
        %s233 = smul.addr %s232, 2
        %s234 = smul.addr %s233, 4
        %s235 = scalar_lea.vmem %s0, %s234
      $region44: #{tpu_custom_call.1} parent=39 // pred_fallthru
        _
    $region40: #{tpu_custom_call.1} parent=5 // pred_fallthru
      _
    %p236 = scmp.le.s32.totalorder 1, %s13
    %p237 = scmp.lt.s32.totalorder %s13, 3
    %p238 = pnand %p236, %p237
    %p239 = pneg %p238
    // Predicated region
    $region45: #{tpu_custom_call.1} parent=5 // pred_check
      _
    $region46: #{tpu_custom_call.1} parent=5 // pred_check_branch
      %241 = sbr.rel (%p238) target = $region48
    $region47: #{tpu_custom_call.1} parent=5 // pred_region
      %s242 = ssub.s32 %s13, 1
      %p243 = scmp.lt.s32.totalorder %s18, 1
      %s244 = scalar_select %p243, %s18, 1
      %s245 = smul.addr %s244, 2
      %s246 = smul.addr %s245, 4
      %s247 = scalar_lea.vmem %s0, %s246
      %p248 = pneg %p39
      %p249 = pneg %p36
      %p250 = pneg %p60
      %p251 = pneg %p57
      %p252 = pneg %p81
      %p253 = pneg %p78
      %p254 = pneg %p102
      %p255 = pneg %p99
      %p256 = pneg %p123
      %p257 = pneg %p120
      %p258 = pneg %p144
      %p259 = pneg %p141
      %p260 = pneg %p165
      %p261 = pneg %p162
      %p262 = pneg %p191
      %p263 = pneg %p188
      %p264 = scmp.lt.s32.totalorder %s18, 1
      %s265 = scalar_select %p264, %s18, 1
      %s266 = smul.addr %s265, 2
      %s267 = smul.addr %s266, 8
      %s268 = scalar_lea.vmem %s7, %s267
      %p269 = scmp.lt.s32.totalorder %s18, 1
      %s270 = scalar_select %p269, %s18, 1
      %s271 = smul.addr %s270, 2
      %s272 = smul.addr %s271, 4
      %s273 = scalar_lea.vmem %s0, %s272
      %p274 = scmp.lt.s32.totalorder %s18, 1
      %s275 = scalar_select %p274, %s18, 1
      %s276 = smul.addr %s275, 2
      %s277 = smul.addr %s276, 8
      %s278 = scalar_lea.vmem %s7, %s277
      %v279 = vld [vmem:[%s273] sm:$0xff]
      %v280 = vld [vmem:[%s1] sm:$0x3f]
      %v281 = vld [vmem:[%s1 + $0x8] sm:$0x3f]
      %v282 = vld [vmem:[%s1 + $0x10] sm:$0x3f]
      %v283 = vld [vmem:[%s3] sm:$0x3f]
      %v284 = vld [vmem:[%s3 + $0x8] sm:$0x3f]
      %v285 = vld [vmem:[%s3 + $0x10] sm:$0x3f]
      %v287 = vcombine.high %v279, %v279
      %288 = vrot.lane.b32.xlu0 %v279, 127
      %v289 = vpop.permute.xlu0 %288
      %290 = vrot.lane.b32.xlu0 %v287, 127
      %v291 = vpop.permute.xlu0 %290
      %vm292 = vcmask 1039360
      %v293 = vsel %vm292, %v289, %v291
      %vm294 = vcmask 31744
      %v296 = vsel %vm294, %v281, 0
      %vm298 = vcmask 1043456
      %v299 = vsel %vm298, %v293, 0
      %v301 = vsel %vm298, %v291, 0
      %303 = vmatprep.subr.mxu0 0.0
      %304 = vmatpush1.msra.mxu0 0.0
      %305 = vmatprep.subr.mxu0 0.0
      %306 = vmatpush1.msra.mxu0 0.0
      %307 = vmatprep.subr.mxu0 0.0
      %308 = vmatpush1.msra.mxu0 0.0
      %309 = vmatprep.subr.mxu0 0.0
      %310 = vmatpush1.msra.mxu0 0.0
      %311 = vmatprep.subr.mxu0 0.0
      %312 = vmatpush1.msra.mxu0 0.0
      %313 = vmatprep.subr.mxu0 0.0
      %314 = vmatpush1.msra.mxu0 0.0
      %315 = vmatprep.subr.mxu0 0.0
      %316 = vmatpush1.msra.mxu0 0.0
      %317 = vmatprep.subr.mxu0 0.0
      %318 = vmatpush1.msra.mxu0 0.0
      %319 = vmatprep.subr.mxu0 0.0
      %320 = vmatpush1.msra.mxu0 0.0
      %321 = vmatprep.subr.mxu0 0.0
      %322 = vmatpush1.msra.mxu0 0.0
      %323 = vmatprep.subr.mxu0 0.0
      %324 = vmatpush1.msra.mxu0 0.0
      %325 = vmatprep.subr.mxu0 0.0
      %326 = vmatpush1.msra.mxu0 0.0
      %327 = vmatprep.subr.mxu0 0.0
      %328 = vmatpush1.msra.mxu0 0.0
      %329 = vmatprep.subr.mxu0 0.0
      %330 = vmatpush1.msra.mxu0 0.0
      %331 = vmatprep.subr.mxu0 0.0
      %332 = vmatpush1.msra.mxu0 0.0
      %333 = vmatprep.subr.mxu0 %v301
      %334 = vmatpush1.msra.mxu0 %v299
      %335 = vmatprep.subr.mxu0 0.0
      %336 = vmatpush2.msra.mxu0 0.0
      %337 = vmatprep.subr.mxu0 0.0
      %338 = vmatpush2.msra.mxu0 0.0
      %339 = vmatprep.subr.mxu0 0.0
      %340 = vmatpush2.msra.mxu0 0.0
      %341 = vmatprep.subr.mxu0 0.0
      %342 = vmatpush2.msra.mxu0 0.0
      %343 = vmatprep.subr.mxu0 0.0
      %344 = vmatpush2.msra.mxu0 0.0
      %345 = vmatprep.subr.mxu0 0.0
      %346 = vmatpush2.msra.mxu0 0.0
      %347 = vmatprep.subr.mxu0 0.0
      %348 = vmatpush2.msra.mxu0 0.0
      %349 = vmatprep.subr.mxu0 0.0
      %350 = vmatpush2.msra.mxu0 0.0
      %351 = vmatprep.subr.mxu0 0.0
      %352 = vmatpush2.msra.mxu0 0.0
      %353 = vmatprep.subr.mxu0 0.0
      %354 = vmatpush2.msra.mxu0 0.0
      %355 = vmatprep.subr.mxu0 0.0
      %356 = vmatpush2.msra.mxu0 0.0
      %357 = vmatprep.subr.mxu0 0.0
      %358 = vmatpush2.msra.mxu0 0.0
      %359 = vmatprep.subr.mxu0 0.0
      %360 = vmatpush2.msra.mxu0 0.0
      %361 = vmatprep.subr.mxu0 0.0
      %362 = vmatpush2.msra.mxu0 0.0
      %363 = vmatprep.subr.mxu0 0.0
      %364 = vmatpush2.msra.mxu0 0.0
      %365 = vmatprep.subr.mxu0 0.0
      %366 = vmatpush2.msra.mxu0 0.0
      %367 = vmatprep.mubr.f32.mxu0 0.0
      %368 = vmatmul.mubr.f32.gmra.mxu0 %v296
      %v369 = vpop.f32.mrf.mxu0
      %v370 = vadd.f32 0.0, %v369
      %v371 = vpop.f32.mrf.mxu0
      %v372 = vadd.f32 0.0, %v371
      %373 = vdwg.mxu0
      %v375 = vsel %vm294, %v280, 0
      %v377 = vsel %vm298, %v279, 0
      %v379 = vsel %vm298, %v287, 0
      %381 = vmatprep.subr.mxu0 0.0
      %382 = vmatpush1.msra.mxu0 0.0
      %383 = vmatprep.subr.mxu0 0.0
      %384 = vmatpush1.msra.mxu0 0.0
      %385 = vmatprep.subr.mxu0 0.0
      %386 = vmatpush1.msra.mxu0 0.0
      %387 = vmatprep.subr.mxu0 0.0
      %388 = vmatpush1.msra.mxu0 0.0
      %389 = vmatprep.subr.mxu0 0.0
      %390 = vmatpush1.msra.mxu0 0.0
      %391 = vmatprep.subr.mxu0 0.0
      %392 = vmatpush1.msra.mxu0 0.0
      %393 = vmatprep.subr.mxu0 0.0
      %394 = vmatpush1.msra.mxu0 0.0
      %395 = vmatprep.subr.mxu0 0.0
      %396 = vmatpush1.msra.mxu0 0.0
      %397 = vmatprep.subr.mxu0 0.0
      %398 = vmatpush1.msra.mxu0 0.0
      %399 = vmatprep.subr.mxu0 0.0
      %400 = vmatpush1.msra.mxu0 0.0
      %401 = vmatprep.subr.mxu0 0.0
      %402 = vmatpush1.msra.mxu0 0.0
      %403 = vmatprep.subr.mxu0 0.0
      %404 = vmatpush1.msra.mxu0 0.0
      %405 = vmatprep.subr.mxu0 0.0
      %406 = vmatpush1.msra.mxu0 0.0
      %407 = vmatprep.subr.mxu0 0.0
      %408 = vmatpush1.msra.mxu0 0.0
      %409 = vmatprep.subr.mxu0 0.0
      %410 = vmatpush1.msra.mxu0 0.0
      %411 = vmatprep.subr.mxu0 %v379
      %412 = vmatpush1.msra.mxu0 %v377
      %413 = vmatprep.subr.mxu0 0.0
      %414 = vmatpush2.msra.mxu0 0.0
      %415 = vmatprep.subr.mxu0 0.0
      %416 = vmatpush2.msra.mxu0 0.0
      %417 = vmatprep.subr.mxu0 0.0
      %418 = vmatpush2.msra.mxu0 0.0
      %419 = vmatprep.subr.mxu0 0.0
      %420 = vmatpush2.msra.mxu0 0.0
      %421 = vmatprep.subr.mxu0 0.0
      %422 = vmatpush2.msra.mxu0 0.0
      %423 = vmatprep.subr.mxu0 0.0
      %424 = vmatpush2.msra.mxu0 0.0
      %425 = vmatprep.subr.mxu0 0.0
      %426 = vmatpush2.msra.mxu0 0.0
      %427 = vmatprep.subr.mxu0 0.0
      %428 = vmatpush2.msra.mxu0 0.0
      %429 = vmatprep.subr.mxu0 0.0
      %430 = vmatpush2.msra.mxu0 0.0
      %431 = vmatprep.subr.mxu0 0.0
      %432 = vmatpush2.msra.mxu0 0.0
      %433 = vmatprep.subr.mxu0 0.0
      %434 = vmatpush2.msra.mxu0 0.0
      %435 = vmatprep.subr.mxu0 0.0
      %436 = vmatpush2.msra.mxu0 0.0
      %437 = vmatprep.subr.mxu0 0.0
      %438 = vmatpush2.msra.mxu0 0.0
      %439 = vmatprep.subr.mxu0 0.0
      %440 = vmatpush2.msra.mxu0 0.0
      %441 = vmatprep.subr.mxu0 0.0
      %442 = vmatpush2.msra.mxu0 0.0
      %443 = vmatprep.subr.mxu0 0.0
      %444 = vmatpush2.msra.mxu0 0.0
      %445 = vmatprep.mubr.f32.mxu0 0.0
      %446 = vmatmul.mubr.f32.gmra.mxu0 %v375
      %v447 = vpop.f32.mrf.mxu0
      %v448 = vadd.f32 %v370, %v447
      %v449 = vpop.f32.mrf.mxu0
      %v450 = vadd.f32 %v372, %v449
      %451 = vdwg.mxu0
      %452 = vrot.lane.b32.xlu0 %v279, 126
      %v453 = vpop.permute.xlu0 %452
      %454 = vrot.lane.b32.xlu0 %v287, 126
      %v455 = vpop.permute.xlu0 %454
      %vm456 = vcmask 1031168
      %v457 = vsel %vm456, %v453, %v455
      %v459 = vsel %vm294, %v282, 0
      %v461 = vsel %vm298, %v457, 0
      %v463 = vsel %vm298, %v455, 0
      %465 = vmatprep.subr.mxu0 0.0
      %466 = vmatpush1.msra.mxu0 0.0
      %467 = vmatprep.subr.mxu0 0.0
      %468 = vmatpush1.msra.mxu0 0.0
      %469 = vmatprep.subr.mxu0 0.0
      %470 = vmatpush1.msra.mxu0 0.0
      %471 = vmatprep.subr.mxu0 0.0
      %472 = vmatpush1.msra.mxu0 0.0
      %473 = vmatprep.subr.mxu0 0.0
      %474 = vmatpush1.msra.mxu0 0.0
      %475 = vmatprep.subr.mxu0 0.0
      %476 = vmatpush1.msra.mxu0 0.0
      %477 = vmatprep.subr.mxu0 0.0
      %478 = vmatpush1.msra.mxu0 0.0
      %479 = vmatprep.subr.mxu0 0.0
      %480 = vmatpush1.msra.mxu0 0.0
      %481 = vmatprep.subr.mxu0 0.0
      %482 = vmatpush1.msra.mxu0 0.0
      %483 = vmatprep.subr.mxu0 0.0
      %484 = vmatpush1.msra.mxu0 0.0
      %485 = vmatprep.subr.mxu0 0.0
      %486 = vmatpush1.msra.mxu0 0.0
      %487 = vmatprep.subr.mxu0 0.0
      %488 = vmatpush1.msra.mxu0 0.0
      %489 = vmatprep.subr.mxu0 0.0
      %490 = vmatpush1.msra.mxu0 0.0
      %491 = vmatprep.subr.mxu0 0.0
      %492 = vmatpush1.msra.mxu0 0.0
      %493 = vmatprep.subr.mxu0 0.0
      %494 = vmatpush1.msra.mxu0 0.0
      %495 = vmatprep.subr.mxu0 %v463
      %496 = vmatpush1.msra.mxu0 %v461
      %497 = vmatprep.subr.mxu0 0.0
      %498 = vmatpush2.msra.mxu0 0.0
      %499 = vmatprep.subr.mxu0 0.0
      %500 = vmatpush2.msra.mxu0 0.0
      %501 = vmatprep.subr.mxu0 0.0
      %502 = vmatpush2.msra.mxu0 0.0
      %503 = vmatprep.subr.mxu0 0.0
      %504 = vmatpush2.msra.mxu0 0.0
      %505 = vmatprep.subr.mxu0 0.0
      %506 = vmatpush2.msra.mxu0 0.0
      %507 = vmatprep.subr.mxu0 0.0
      %508 = vmatpush2.msra.mxu0 0.0
      %509 = vmatprep.subr.mxu0 0.0
      %510 = vmatpush2.msra.mxu0 0.0
      %511 = vmatprep.subr.mxu0 0.0
      %512 = vmatpush2.msra.mxu0 0.0
      %513 = vmatprep.subr.mxu0 0.0
      %514 = vmatpush2.msra.mxu0 0.0
      %515 = vmatprep.subr.mxu0 0.0
      %516 = vmatpush2.msra.mxu0 0.0
      %517 = vmatprep.subr.mxu0 0.0
      %518 = vmatpush2.msra.mxu0 0.0
      %519 = vmatprep.subr.mxu0 0.0
      %520 = vmatpush2.msra.mxu0 0.0
      %521 = vmatprep.subr.mxu0 0.0
      %522 = vmatpush2.msra.mxu0 0.0
      %523 = vmatprep.subr.mxu0 0.0
      %524 = vmatpush2.msra.mxu0 0.0
      %525 = vmatprep.subr.mxu0 0.0
      %526 = vmatpush2.msra.mxu0 0.0
      %527 = vmatprep.subr.mxu0 0.0
      %528 = vmatpush2.msra.mxu0 0.0
      %529 = vmatprep.mubr.f32.mxu0 0.0
      %530 = vmatmul.mubr.f32.gmra.mxu0 %v459
      %v531 = vpop.f32.mrf.mxu0
      %v532 = vadd.f32 0.0, %v531
      %v533 = vpop.f32.mrf.mxu0
      %v534 = vadd.f32 0.0, %v533
      %535 = vdwg.mxu0
      %v536 = vadd.f32 %v448, %v532
      %v537 = vadd.f32 %v450, %v534
      %v538 = vld [vmem:[%s2] sm:$0x3f]
      %540 = vset.pattern.permute.xlu0 0
      %541 = vperm.xlu0 %540, %v538
      %v542 = vpop.permute.xlu0 %541
      %v544 = vadd.f32 %v536, %v542
      %v545 = vadd.f32 %v537, %v542
      %v546 = vmax.f32 %v544, 0.0
      %v547 = vmax.f32 %v545, 0.0
      %550 = vrot.lane.b32.xlu0 %v546, 127
      %v551 = vpop.permute.xlu0 %550
      %552 = vrot.lane.b32.xlu0 %v547, 127
      %v553 = vpop.permute.xlu0 %552
      %v554 = vsel %vm292, %v551, %v553
      %vm555 = vcmask 48128
      %v557 = vsel %vm555, %v284, 0
      %vm559 = vcmask 1045504
      %v560 = vsel %vm559, %v554, 0
      %v562 = vsel %vm559, %v553, 0
      %564 = vmatprep.subr.mxu0 0.0
      %565 = vmatpush1.msra.mxu0 0.0
      %566 = vmatprep.subr.mxu0 0.0
      %567 = vmatpush1.msra.mxu0 0.0
      %568 = vmatprep.subr.mxu0 0.0
      %569 = vmatpush1.msra.mxu0 0.0
      %570 = vmatprep.subr.mxu0 0.0
      %571 = vmatpush1.msra.mxu0 0.0
      %572 = vmatprep.subr.mxu0 0.0
      %573 = vmatpush1.msra.mxu0 0.0
      %574 = vmatprep.subr.mxu0 0.0
      %575 = vmatpush1.msra.mxu0 0.0
      %576 = vmatprep.subr.mxu0 0.0
      %577 = vmatpush1.msra.mxu0 0.0
      %578 = vmatprep.subr.mxu0 0.0
      %579 = vmatpush1.msra.mxu0 0.0
      %580 = vmatprep.subr.mxu0 0.0
      %581 = vmatpush1.msra.mxu0 0.0
      %582 = vmatprep.subr.mxu0 0.0
      %583 = vmatpush1.msra.mxu0 0.0
      %584 = vmatprep.subr.mxu0 0.0
      %585 = vmatpush1.msra.mxu0 0.0
      %586 = vmatprep.subr.mxu0 0.0
      %587 = vmatpush1.msra.mxu0 0.0
      %588 = vmatprep.subr.mxu0 0.0
      %589 = vmatpush1.msra.mxu0 0.0
      %590 = vmatprep.subr.mxu0 0.0
      %591 = vmatpush1.msra.mxu0 0.0
      %592 = vmatprep.subr.mxu0 0.0
      %593 = vmatpush1.msra.mxu0 0.0
      %594 = vmatprep.subr.mxu0 %v562
      %595 = vmatpush1.msra.mxu0 %v560
      %596 = vmatprep.subr.mxu0 0.0
      %597 = vmatpush2.msra.mxu0 0.0
      %598 = vmatprep.subr.mxu0 0.0
      %599 = vmatpush2.msra.mxu0 0.0
      %600 = vmatprep.subr.mxu0 0.0
      %601 = vmatpush2.msra.mxu0 0.0
      %602 = vmatprep.subr.mxu0 0.0
      %603 = vmatpush2.msra.mxu0 0.0
      %604 = vmatprep.subr.mxu0 0.0
      %605 = vmatpush2.msra.mxu0 0.0
      %606 = vmatprep.subr.mxu0 0.0
      %607 = vmatpush2.msra.mxu0 0.0
      %608 = vmatprep.subr.mxu0 0.0
      %609 = vmatpush2.msra.mxu0 0.0
      %610 = vmatprep.subr.mxu0 0.0
      %611 = vmatpush2.msra.mxu0 0.0
      %612 = vmatprep.subr.mxu0 0.0
      %613 = vmatpush2.msra.mxu0 0.0
      %614 = vmatprep.subr.mxu0 0.0
      %615 = vmatpush2.msra.mxu0 0.0
      %616 = vmatprep.subr.mxu0 0.0
      %617 = vmatpush2.msra.mxu0 0.0
      %618 = vmatprep.subr.mxu0 0.0
      %619 = vmatpush2.msra.mxu0 0.0
      %620 = vmatprep.subr.mxu0 0.0
      %621 = vmatpush2.msra.mxu0 0.0
      %622 = vmatprep.subr.mxu0 0.0
      %623 = vmatpush2.msra.mxu0 0.0
      %624 = vmatprep.subr.mxu0 0.0
      %625 = vmatpush2.msra.mxu0 0.0
      %626 = vmatprep.subr.mxu0 0.0
      %627 = vmatpush2.msra.mxu0 0.0
      %628 = vmatprep.mubr.f32.mxu0 0.0
      %629 = vmatmul.mubr.f32.gmra.mxu0 %v557
      %v630 = vpop.f32.mrf.mxu0
      %v631 = vadd.f32 0.0, %v630
      %v632 = vpop.f32.mrf.mxu0
      %v633 = vadd.f32 0.0, %v632
      %634 = vdwg.mxu0
      %v636 = vsel %vm555, %v283, 0
      %v638 = vsel %vm559, %v546, 0
      %v640 = vsel %vm559, %v547, 0
      %642 = vmatprep.subr.mxu0 0.0
      %643 = vmatpush1.msra.mxu0 0.0
      %644 = vmatprep.subr.mxu0 0.0
      %645 = vmatpush1.msra.mxu0 0.0
      %646 = vmatprep.subr.mxu0 0.0
      %647 = vmatpush1.msra.mxu0 0.0
      %648 = vmatprep.subr.mxu0 0.0
      %649 = vmatpush1.msra.mxu0 0.0
      %650 = vmatprep.subr.mxu0 0.0
      %651 = vmatpush1.msra.mxu0 0.0
      %652 = vmatprep.subr.mxu0 0.0
      %653 = vmatpush1.msra.mxu0 0.0
      %654 = vmatprep.subr.mxu0 0.0
      %655 = vmatpush1.msra.mxu0 0.0
      %656 = vmatprep.subr.mxu0 0.0
      %657 = vmatpush1.msra.mxu0 0.0
      %658 = vmatprep.subr.mxu0 0.0
      %659 = vmatpush1.msra.mxu0 0.0
      %660 = vmatprep.subr.mxu0 0.0
      %661 = vmatpush1.msra.mxu0 0.0
      %662 = vmatprep.subr.mxu0 0.0
      %663 = vmatpush1.msra.mxu0 0.0
      %664 = vmatprep.subr.mxu0 0.0
      %665 = vmatpush1.msra.mxu0 0.0
      %666 = vmatprep.subr.mxu0 0.0
      %667 = vmatpush1.msra.mxu0 0.0
      %668 = vmatprep.subr.mxu0 0.0
      %669 = vmatpush1.msra.mxu0 0.0
      %670 = vmatprep.subr.mxu0 0.0
      %671 = vmatpush1.msra.mxu0 0.0
      %672 = vmatprep.subr.mxu0 %v640
      %673 = vmatpush1.msra.mxu0 %v638
      %674 = vmatprep.subr.mxu0 0.0
      %675 = vmatpush2.msra.mxu0 0.0
      %676 = vmatprep.subr.mxu0 0.0
      %677 = vmatpush2.msra.mxu0 0.0
      %678 = vmatprep.subr.mxu0 0.0
      %679 = vmatpush2.msra.mxu0 0.0
      %680 = vmatprep.subr.mxu0 0.0
      %681 = vmatpush2.msra.mxu0 0.0
      %682 = vmatprep.subr.mxu0 0.0
      %683 = vmatpush2.msra.mxu0 0.0
      %684 = vmatprep.subr.mxu0 0.0
      %685 = vmatpush2.msra.mxu0 0.0
      %686 = vmatprep.subr.mxu0 0.0
      %687 = vmatpush2.msra.mxu0 0.0
      %688 = vmatprep.subr.mxu0 0.0
      %689 = vmatpush2.msra.mxu0 0.0
      %690 = vmatprep.subr.mxu0 0.0
      %691 = vmatpush2.msra.mxu0 0.0
      %692 = vmatprep.subr.mxu0 0.0
      %693 = vmatpush2.msra.mxu0 0.0
      %694 = vmatprep.subr.mxu0 0.0
      %695 = vmatpush2.msra.mxu0 0.0
      %696 = vmatprep.subr.mxu0 0.0
      %697 = vmatpush2.msra.mxu0 0.0
      %698 = vmatprep.subr.mxu0 0.0
      %699 = vmatpush2.msra.mxu0 0.0
      %700 = vmatprep.subr.mxu0 0.0
      %701 = vmatpush2.msra.mxu0 0.0
      %702 = vmatprep.subr.mxu0 0.0
      %703 = vmatpush2.msra.mxu0 0.0
      %704 = vmatprep.subr.mxu0 0.0
      %705 = vmatpush2.msra.mxu0 0.0
      %706 = vmatprep.mubr.f32.mxu0 0.0
      %707 = vmatmul.mubr.f32.gmra.mxu0 %v636
      %v708 = vpop.f32.mrf.mxu0
      %v709 = vadd.f32 %v631, %v708
      %v710 = vpop.f32.mrf.mxu0
      %v711 = vadd.f32 %v633, %v710
      %712 = vdwg.mxu0
      %713 = vrot.lane.b32.xlu0 %v546, 126
      %v714 = vpop.permute.xlu0 %713
      %715 = vrot.lane.b32.xlu0 %v547, 126
      %v716 = vpop.permute.xlu0 %715
      %v717 = vsel %vm456, %v714, %v716
      %v719 = vsel %vm555, %v285, 0
      %v721 = vsel %vm559, %v717, 0
      %v723 = vsel %vm559, %v716, 0
      %725 = vmatprep.subr.mxu0 0.0
      %726 = vmatpush1.msra.mxu0 0.0
      %727 = vmatprep.subr.mxu0 0.0
      %728 = vmatpush1.msra.mxu0 0.0
      %729 = vmatprep.subr.mxu0 0.0
      %730 = vmatpush1.msra.mxu0 0.0
      %731 = vmatprep.subr.mxu0 0.0
      %732 = vmatpush1.msra.mxu0 0.0
      %733 = vmatprep.subr.mxu0 0.0
      %734 = vmatpush1.msra.mxu0 0.0
      %735 = vmatprep.subr.mxu0 0.0
      %736 = vmatpush1.msra.mxu0 0.0
      %737 = vmatprep.subr.mxu0 0.0
      %738 = vmatpush1.msra.mxu0 0.0
      %739 = vmatprep.subr.mxu0 0.0
      %740 = vmatpush1.msra.mxu0 0.0
      %741 = vmatprep.subr.mxu0 0.0
      %742 = vmatpush1.msra.mxu0 0.0
      %743 = vmatprep.subr.mxu0 0.0
      %744 = vmatpush1.msra.mxu0 0.0
      %745 = vmatprep.subr.mxu0 0.0
      %746 = vmatpush1.msra.mxu0 0.0
      %747 = vmatprep.subr.mxu0 0.0
      %748 = vmatpush1.msra.mxu0 0.0
      %749 = vmatprep.subr.mxu0 0.0
      %750 = vmatpush1.msra.mxu0 0.0
      %751 = vmatprep.subr.mxu0 0.0
      %752 = vmatpush1.msra.mxu0 0.0
      %753 = vmatprep.subr.mxu0 0.0
      %754 = vmatpush1.msra.mxu0 0.0
      %755 = vmatprep.subr.mxu0 %v723
      %756 = vmatpush1.msra.mxu0 %v721
      %757 = vmatprep.subr.mxu0 0.0
      %758 = vmatpush2.msra.mxu0 0.0
      %759 = vmatprep.subr.mxu0 0.0
      %760 = vmatpush2.msra.mxu0 0.0
      %761 = vmatprep.subr.mxu0 0.0
      %762 = vmatpush2.msra.mxu0 0.0
      %763 = vmatprep.subr.mxu0 0.0
      %764 = vmatpush2.msra.mxu0 0.0
      %765 = vmatprep.subr.mxu0 0.0
      %766 = vmatpush2.msra.mxu0 0.0
      %767 = vmatprep.subr.mxu0 0.0
      %768 = vmatpush2.msra.mxu0 0.0
      %769 = vmatprep.subr.mxu0 0.0
      %770 = vmatpush2.msra.mxu0 0.0
      %771 = vmatprep.subr.mxu0 0.0
      %772 = vmatpush2.msra.mxu0 0.0
      %773 = vmatprep.subr.mxu0 0.0
      %774 = vmatpush2.msra.mxu0 0.0
      %775 = vmatprep.subr.mxu0 0.0
      %776 = vmatpush2.msra.mxu0 0.0
      %777 = vmatprep.subr.mxu0 0.0
      %778 = vmatpush2.msra.mxu0 0.0
      %779 = vmatprep.subr.mxu0 0.0
      %780 = vmatpush2.msra.mxu0 0.0
      %781 = vmatprep.subr.mxu0 0.0
      %782 = vmatpush2.msra.mxu0 0.0
      %783 = vmatprep.subr.mxu0 0.0
      %784 = vmatpush2.msra.mxu0 0.0
      %785 = vmatprep.subr.mxu0 0.0
      %786 = vmatpush2.msra.mxu0 0.0
      %787 = vmatprep.subr.mxu0 0.0
      %788 = vmatpush2.msra.mxu0 0.0
      %789 = vmatprep.mubr.f32.mxu0 0.0
      %790 = vmatmul.mubr.f32.gmra.mxu0 %v719
      %v791 = vpop.f32.mrf.mxu0
      %v792 = vadd.f32 0.0, %v791
      %v793 = vpop.f32.mrf.mxu0
      %v794 = vadd.f32 0.0, %v793
      %795 = vdwg.mxu0
      %v796 = vadd.f32 %v709, %v792
      %v797 = vadd.f32 %v711, %v794
      %v798 = vld [vmem:[%s4] sm:$0x3f]
      %800 = vset.pattern.permute.xlu0 0
      %801 = vperm.xlu0 %800, %v798
      %v802 = vpop.permute.xlu0 %801
      %v804 = vadd.f32 %v796, %v802
      %v805 = vadd.f32 %v797, %v802
      %v806 = vmax.f32 %v804, 0.0
      %v807 = vmax.f32 %v805, 0.0
      %v808 = vld [vmem:[%s5] sm:$0x3f]
      %v809 = vld [vmem:[%s6] sm:$0x3f]
      %811 = vset.pattern.permute.xlu0 0
      %812 = vperm.xlu0 %811, %v809
      %v813 = vpop.permute.xlu0 %812
      %v816 = vsel %vm294, %v808, 0
      %818 = vmatprep.subr.mxu0 0.0
      %819 = vmatpush1.msra.mxu0 0.0
      %820 = vmatprep.subr.mxu0 0.0
      %821 = vmatpush1.msra.mxu0 0.0
      %822 = vmatprep.subr.mxu0 0.0
      %823 = vmatpush1.msra.mxu0 0.0
      %824 = vmatprep.subr.mxu0 0.0
      %825 = vmatpush1.msra.mxu0 0.0
      %826 = vmatprep.subr.mxu0 0.0
      %827 = vmatpush1.msra.mxu0 0.0
      %828 = vmatprep.subr.mxu0 0.0
      %829 = vmatpush1.msra.mxu0 0.0
      %830 = vmatprep.subr.mxu0 0.0
      %831 = vmatpush1.msra.mxu0 0.0
      %832 = vmatprep.subr.mxu0 0.0
      %833 = vmatpush1.msra.mxu0 0.0
      %834 = vmatprep.subr.mxu0 0.0
      %835 = vmatpush1.msra.mxu0 0.0
      %836 = vmatprep.subr.mxu0 0.0
      %837 = vmatpush1.msra.mxu0 0.0
      %838 = vmatprep.subr.mxu0 0.0
      %839 = vmatpush1.msra.mxu0 0.0
      %840 = vmatprep.subr.mxu0 0.0
      %841 = vmatpush1.msra.mxu0 0.0
      %842 = vmatprep.subr.mxu0 0.0
      %843 = vmatpush1.msra.mxu0 0.0
      %844 = vmatprep.subr.mxu0 0.0
      %845 = vmatpush1.msra.mxu0 0.0
      %846 = vmatprep.subr.mxu0 0.0
      %847 = vmatpush1.msra.mxu0 0.0
      %848 = vmatprep.subr.mxu0 %v463
      %849 = vmatpush1.msra.mxu0 %v461
      %850 = vmatprep.subr.mxu0 0.0
      %851 = vmatpush2.msra.mxu0 0.0
      %852 = vmatprep.subr.mxu0 0.0
      %853 = vmatpush2.msra.mxu0 0.0
      %854 = vmatprep.subr.mxu0 0.0
      %855 = vmatpush2.msra.mxu0 0.0
      %856 = vmatprep.subr.mxu0 0.0
      %857 = vmatpush2.msra.mxu0 0.0
      %858 = vmatprep.subr.mxu0 0.0
      %859 = vmatpush2.msra.mxu0 0.0
      %860 = vmatprep.subr.mxu0 0.0
      %861 = vmatpush2.msra.mxu0 0.0
      %862 = vmatprep.subr.mxu0 0.0
      %863 = vmatpush2.msra.mxu0 0.0
      %864 = vmatprep.subr.mxu0 0.0
      %865 = vmatpush2.msra.mxu0 0.0
      %866 = vmatprep.subr.mxu0 0.0
      %867 = vmatpush2.msra.mxu0 0.0
      %868 = vmatprep.subr.mxu0 0.0
      %869 = vmatpush2.msra.mxu0 0.0
      %870 = vmatprep.subr.mxu0 0.0
      %871 = vmatpush2.msra.mxu0 0.0
      %872 = vmatprep.subr.mxu0 0.0
      %873 = vmatpush2.msra.mxu0 0.0
      %874 = vmatprep.subr.mxu0 0.0
      %875 = vmatpush2.msra.mxu0 0.0
      %876 = vmatprep.subr.mxu0 0.0
      %877 = vmatpush2.msra.mxu0 0.0
      %878 = vmatprep.subr.mxu0 0.0
      %879 = vmatpush2.msra.mxu0 0.0
      %880 = vmatprep.subr.mxu0 0.0
      %881 = vmatpush2.msra.mxu0 0.0
      %882 = vmatprep.mubr.f32.mxu0 0.0
      %883 = vmatmul.mubr.f32.gmra.mxu0 %v816
      %v884 = vpop.f32.mrf.mxu0
      %v885 = vadd.f32 %v813, %v884
      %v886 = vpop.f32.mrf.mxu0
      %v887 = vadd.f32 %v813, %v886
      %888 = vdwg.mxu0
      %v889 = vadd.f32 %v806, %v885
      %v890 = vadd.f32 %v807, %v887
      %v891 = vmax.f32 %v889, 0.0
      %v892 = vmax.f32 %v890, 0.0
      %893 = vst [vmem:[%s278] sm:$0x3f] %v891
      %vm894 = vcmask 62464
      %895 = vst.msk [vmem:[%s278 + $0x8] sm:$0x3f] %vm894, %v892
      %p896 = scmp.lt.s32.totalorder %s18, 1
      %s897 = scalar_select %p896, %s18, 1
      %s898 = smul.addr %s897, 2
      %s899 = smul.addr %s898, 8
      %s900 = scalar_lea.vmem %s7, %s899
      // Predicated region
      $region49: #{tpu_custom_call.1} parent=47 // pred_check
        %p901 = pneg %p188
      $region50: #{tpu_custom_call.1} parent=47 // pred_check_branch
        %903 = sbr.rel (%p901) target = $region52
      $region51: #{tpu_custom_call.1} parent=47 // pred_region
        _
      $region52: #{tpu_custom_call.1} parent=47 // pred_fallthru
        _
    $region48: #{tpu_custom_call.1} parent=5 // pred_fallthru
      _
    %p904 = scmp.le.s32.totalorder 2, %s13
    // Predicated region
    $region53: #{tpu_custom_call.1} parent=5 // pred_check
      %p905 = pneg %p904
    $region54: #{tpu_custom_call.1} parent=5 // pred_check_branch
      %907 = sbr.rel (%p905) target = $region56
    $region55: #{tpu_custom_call.1} parent=5 // pred_region
      %s908 = ssub.s32 %s13, 2
      // Predicated region
      $region57: #{tpu_custom_call.1} parent=55 // pred_check
        %p909 = pneg %p194
      $region58: #{tpu_custom_call.1} parent=55 // pred_check_branch
        %911 = sbr.rel (%p909) target = $region60
      $region59: #{tpu_custom_call.1} parent=55 // pred_region
        %p912 = scmp.lt.s32.totalorder %s19, 1
        %s913 = scalar_select %p912, %s19, 1
        %s914 = smul.addr %s913, 2
        %s915 = smul.addr %s914, 8
        %s916 = scalar_lea.vmem %s7, %s915
      $region60: #{tpu_custom_call.1} parent=55 // pred_fallthru
        _
    $region56: #{tpu_custom_call.1} parent=5 // pred_fallthru
      _
  $region6: #{tpu_custom_call.1} parent=0 // loop_footer
    %s17 = sadd.s32 1, %s13
  $region7: #{tpu_custom_call.1} parent=0 // loop_footer_branch
    %12 = sbr.rel target = $region3
  $region8: #{tpu_custom_call.1} parent=0 // loop_exit
    _

</llo_original>
